<compile_context>
chip_gen: v7x
topology: tpu7x:2x2x1
jax: 0.10.0
libtpu: 0.0.40
codegen_flags: <defaults>
</compile_context>

<pallas_src>
import functools

import jax
import jax.numpy as jnp
from jax import lax
from jax.experimental import pallas as pl
from jax.experimental.pallas import tpu as pltpu


def _round_up(x, m):
    return ((x + m - 1) // m) * m


def _conv_bn_act_kernel(x_ref, w_ref, b_ref, o_ref, *, tap_offsets, q_pad):
    """Fused direct conv (per-tap MXU matmuls) + folded-BN bias + ReLU.

    x_ref: (1, C_pad, Lp)      bf16  one padded image; channels on sublanes,
                                     flattened (zero-extended) spatial on lanes.
    w_ref: (KH*KW, OC, C_pad)  bf16  per-tap weight matrices (BN scale folded in).
    b_ref: (OC, 1)             f32   folded BN bias (beta - mean*scale).
    o_ref: (1, OC, Qp)         f32   conv+bn+relu at the first Qp flat positions
                                     (garbage wrap/pad columns sliced off by host).
    """
    oc = o_ref.shape[1]
    acc = jnp.zeros((oc, q_pad), dtype=jnp.float32)
    # Static (unrolled) loop over the KH*KW taps; each tap is a shifted view of the
    # VMEM-resident image -- the im2col "patches" never touch HBM.
    for t, d in enumerate(tap_offsets):
        win = x_ref[0, :, pl.ds(d, q_pad)]                       # (C_pad, Qp) bf16
        acc = acc + jnp.dot(w_ref[t], win,
                            preferred_element_type=jnp.float32)  # (OC, Qp) f32
    y = acc + b_ref[...]                                         # (OC,Qp) + (OC,1)
    o_ref[0] = jnp.maximum(y, 0.0).astype(o_ref.dtype)


def conv2d_bn_act(x_nchw, weight_oihw, gamma, beta, running_mean, running_var,
                  *, stride=1, padding=0, eps=1e-5):
    """Forward of Conv2dBnAct. x_nchw: (N, C, H, W) -> (N, OC, OH, OW) float32."""
    N, C, H, W = x_nchw.shape
    OC, C_w, KH, KW = weight_oihw.shape
    assert C == C_w, "channel mismatch"

    OH = (H + 2 * padding - KH) // stride + 1
    OW = (W + 2 * padding - KW) // stride + 1
    Hp, Wp = H + 2 * padding, W + 2 * padding

    # ---- host glue: fold eval-mode BN into weights/bias, lay out lane-dense ----
    scale = gamma / jnp.sqrt(running_var + eps)                        # (OC,)
    bias = (beta - running_mean * scale).astype(jnp.float32).reshape(OC, 1)
    w_scaled = weight_oihw * scale[:, None, None, None]                # (OC,C,KH,KW)

    C_pad = max(8, _round_up(C, 8))                                    # sublane-aligned
    if C_pad != C:
        w_scaled = jnp.pad(w_scaled, ((0, 0), (0, C_pad - C), (0, 0), (0, 0)))
    # Per-tap (OC, C_pad) matrices, tap t = kh*KW + kw, bf16 stream.
    w_taps = jnp.transpose(w_scaled, (2, 3, 0, 1)).reshape(KH * KW, OC, C_pad)
    w_taps = w_taps.astype(jnp.bfloat16)

    # Flattened-shift geometry: tap (kh, kw) is a flat shift of kh*Wp + kw.
    OH_full = Hp - KH + 1                      # dense (stride-1) output rows
    D = (KH - 1) * Wp + (KW - 1)               # largest tap shift
    Qp = _round_up(OH_full * Wp, 128)          # lane-dense output width (dense stores)
    Lp = _round_up(D + Qp, 128)                # flattened input length (>= Hp*Wp)

    xp = jnp.pad(x_nchw, ((0, 0), (0, 0), (padding, padding), (padding, padding)))
    x3 = xp.reshape(N, C, Hp * Wp)
    x3 = jnp.pad(x3, ((0, 0), (0, C_pad - C), (0, Lp - Hp * Wp))).astype(jnp.bfloat16)

    tap_offsets = tuple(kh * Wp + kw for kh in range(KH) for kw in range(KW))
    kernel = functools.partial(_conv_bn_act_kernel,
                               tap_offsets=tap_offsets, q_pad=Qp)

    cost = pl.CostEstimate(
        flops=2 * N * OC * C_pad * KH * KW * Qp,
        transcendentals=0,
        bytes_accessed=(N * C_pad * Lp * 2 + KH * KW * OC * C_pad * 2
                        + OC * 4 + N * OC * Qp * 4),
    )

    out3 = pl.pallas_call(
        kernel,
        out_shape=jax.ShapeDtypeStruct((N, OC, Qp), jnp.float32),
        grid_spec=pltpu.PrefetchScalarGridSpec(
            num_scalar_prefetch=0,
            grid=(N,),
            in_specs=[
                pl.BlockSpec((1, C_pad, Lp), lambda n: (n, 0, 0)),
                pl.BlockSpec((KH * KW, OC, C_pad), lambda n: (0, 0, 0)),
                pl.BlockSpec((OC, 1), lambda n: (0, 0)),
            ],
            out_specs=pl.BlockSpec((1, OC, Qp), lambda n: (n, 0, 0)),
        ),
        compiler_params=pltpu.CompilerParams(
            dimension_semantics=("parallel",),
        ),
        cost_estimate=cost,
    )(x3, w_taps, bias)

    # Map flattened positions back to (rows, cols) and keep the valid strided ones.
    out4 = out3[:, :, : OH_full * Wp].reshape(N, OC, OH_full, Wp)
    out = out4[:, :,
               0:(OH - 1) * stride + 1:stride,
               0:(OW - 1) * stride + 1:stride]
    return out


def _reference(x_nchw, weight_oihw, gamma, beta, mean, var, *, stride, padding, eps=1e-5):
    y = lax.conv_general_dilated(
        x_nchw.astype(jnp.float32),
        weight_oihw.astype(jnp.float32),
        window_strides=(stride, stride),
        padding=[(padding, padding), (padding, padding)],
        dimension_numbers=("NCHW", "OIHW", "NCHW"),
    )
    s = (gamma / jnp.sqrt(var + eps)).reshape(1, -1, 1, 1)
    b = (beta - mean * gamma / jnp.sqrt(var + eps)).reshape(1, -1, 1, 1)
    return jnp.maximum(y * s + b, 0.0)


if __name__ == "__main__":
    key = jax.random.PRNGKey(0)
    k1, k2, k3, k4, k5, k6 = jax.random.split(key, 6)

    # Module config: in_channels=4, out_channels=8, kernel_size=3, padding=1, stride=1
    N, C, H, W = 2, 4, 16, 16
    OC, KH, KW = 8, 3, 3
    stride, padding = 1, 1

    x = jax.random.normal(k1, (N, C, H, W), dtype=jnp.float32)
    weight = jax.random.normal(k2, (OC, C, KH, KW), dtype=jnp.float32) * 0.1
    gamma = 1.0 + 0.1 * jax.random.normal(k3, (OC,), dtype=jnp.float32)
    beta = 0.1 * jax.random.normal(k4, (OC,), dtype=jnp.float32)
    running_mean = 0.1 * jax.random.normal(k5, (OC,), dtype=jnp.float32)
    running_var = jnp.abs(1.0 + 0.1 * jax.random.normal(k6, (OC,), dtype=jnp.float32))

    fn = jax.jit(functools.partial(conv2d_bn_act, stride=stride, padding=padding))
    out = fn(x, weight, gamma, beta, running_mean, running_var)
    out = jax.block_until_ready(out)

    ref = _reference(x, weight, gamma, beta, running_mean, running_var,
                     stride=stride, padding=padding)
    assert out.shape == (N, OC, H, W), out.shape
    # bf16 operand streams + f32 accumulation -> loosened tolerance vs f32 ref.
    assert jnp.allclose(out, ref, atol=5e-2, rtol=5e-2), float(
        jnp.max(jnp.abs(out - ref))
    )
    print("KERNEL_OK")
</pallas_src>

<mosaic_0001>
module attributes {stable_mosaic.version = 11 : i64} {
  func.func @_conv_bn_act_kernel(%arg0: i32, %arg1: memref<1x8x512xbf16, #tpu.memory_space<vmem>>, %arg2: memref<9x8x8xbf16, #tpu.memory_space<vmem>>, %arg3: memref<8x1xf32, #tpu.memory_space<vmem>>, %arg4: memref<1x8x384xf32, #tpu.memory_space<vmem>>) attributes {dimension_semantics = [#tpu.dimension_semantics<parallel>], iteration_bounds = array<i64: 2>, scalar_prefetch = 0 : i64, scratch_operands = 0 : i64, tpu.core_type = #tpu.core_type<tc>, window_params = [{transform_indices = @transform_0, window_bounds = array<i64: 1, 8, 512>}, {pipeline_mode = #tpu.pipeline_mode<synchronous>, transform_indices = @transform_1, window_bounds = array<i64: 9, 8, 8>}, {pipeline_mode = #tpu.pipeline_mode<synchronous>, transform_indices = @transform_2, window_bounds = array<i64: 8, 1>}, {transform_indices = @transform_3, window_bounds = array<i64: 1, 8, 384>}]} {
    %cst = arith.constant 0.000000e+00 : f32
    %0 = vector.broadcast %cst : f32 to vector<8x384xf32>
    %c0 = arith.constant 0 : index
    %c0_0 = arith.constant 0 : index
    %c0_1 = arith.constant 0 : index
    %1 = vector.load %arg1[%c0, %c0_0, %c0_1] : memref<1x8x512xbf16, #tpu.memory_space<vmem>>, vector<1x8x384xbf16>
    %2 = vector.shape_cast %1 : vector<1x8x384xbf16> to vector<8x384xbf16>
    %c0_2 = arith.constant 0 : index
    %c0_3 = arith.constant 0 : index
    %c0_4 = arith.constant 0 : index
    %3 = vector.load %arg2[%c0_2, %c0_3, %c0_4] : memref<9x8x8xbf16, #tpu.memory_space<vmem>>, vector<1x8x8xbf16>
    %4 = vector.shape_cast %3 : vector<1x8x8xbf16> to vector<8x8xbf16>
    %cst_5 = arith.constant dense<0.000000e+00> : vector<8x384xf32>
    %5 = tpu.matmul %4, %2, %cst_5 {dimension_numbers = #tpu.dot_dimension_numbers<[1], [0], [0], [1], [0, 0, 1, 1], [], []>} : vector<8x8xbf16>, vector<8x384xbf16>, vector<8x384xf32> -> vector<8x384xf32>
    %6 = arith.addf %0, %5 : vector<8x384xf32>
    %c0_6 = arith.constant 0 : index
    %c0_7 = arith.constant 0 : index
    %c1 = arith.constant 1 : index
    %7 = vector.load %arg1[%c0_6, %c0_7, %c1] : memref<1x8x512xbf16, #tpu.memory_space<vmem>>, vector<1x8x384xbf16>
    %8 = vector.shape_cast %7 : vector<1x8x384xbf16> to vector<8x384xbf16>
    %c1_8 = arith.constant 1 : index
    %c0_9 = arith.constant 0 : index
    %c0_10 = arith.constant 0 : index
    %9 = vector.load %arg2[%c1_8, %c0_9, %c0_10] : memref<9x8x8xbf16, #tpu.memory_space<vmem>>, vector<1x8x8xbf16>
    %10 = vector.shape_cast %9 : vector<1x8x8xbf16> to vector<8x8xbf16>
    %cst_11 = arith.constant dense<0.000000e+00> : vector<8x384xf32>
    %11 = tpu.matmul %10, %8, %cst_11 {dimension_numbers = #tpu.dot_dimension_numbers<[1], [0], [0], [1], [0, 0, 1, 1], [], []>} : vector<8x8xbf16>, vector<8x384xbf16>, vector<8x384xf32> -> vector<8x384xf32>
    %12 = arith.addf %6, %11 : vector<8x384xf32>
    %c0_12 = arith.constant 0 : index
    %c0_13 = arith.constant 0 : index
    %c2 = arith.constant 2 : index
    %13 = vector.load %arg1[%c0_12, %c0_13, %c2] : memref<1x8x512xbf16, #tpu.memory_space<vmem>>, vector<1x8x384xbf16>
    %14 = vector.shape_cast %13 : vector<1x8x384xbf16> to vector<8x384xbf16>
    %c2_14 = arith.constant 2 : index
    %c0_15 = arith.constant 0 : index
    %c0_16 = arith.constant 0 : index
    %15 = vector.load %arg2[%c2_14, %c0_15, %c0_16] : memref<9x8x8xbf16, #tpu.memory_space<vmem>>, vector<1x8x8xbf16>
    %16 = vector.shape_cast %15 : vector<1x8x8xbf16> to vector<8x8xbf16>
    %cst_17 = arith.constant dense<0.000000e+00> : vector<8x384xf32>
    %17 = tpu.matmul %16, %14, %cst_17 {dimension_numbers = #tpu.dot_dimension_numbers<[1], [0], [0], [1], [0, 0, 1, 1], [], []>} : vector<8x8xbf16>, vector<8x384xbf16>, vector<8x384xf32> -> vector<8x384xf32>
    %18 = arith.addf %12, %17 : vector<8x384xf32>
    %c0_18 = arith.constant 0 : index
    %c0_19 = arith.constant 0 : index
    %c18 = arith.constant 18 : index
    %19 = vector.load %arg1[%c0_18, %c0_19, %c18] : memref<1x8x512xbf16, #tpu.memory_space<vmem>>, vector<1x8x384xbf16>
    %20 = vector.shape_cast %19 : vector<1x8x384xbf16> to vector<8x384xbf16>
    %c3 = arith.constant 3 : index
    %c0_20 = arith.constant 0 : index
    %c0_21 = arith.constant 0 : index
    %21 = vector.load %arg2[%c3, %c0_20, %c0_21] : memref<9x8x8xbf16, #tpu.memory_space<vmem>>, vector<1x8x8xbf16>
    %22 = vector.shape_cast %21 : vector<1x8x8xbf16> to vector<8x8xbf16>
    %cst_22 = arith.constant dense<0.000000e+00> : vector<8x384xf32>
    %23 = tpu.matmul %22, %20, %cst_22 {dimension_numbers = #tpu.dot_dimension_numbers<[1], [0], [0], [1], [0, 0, 1, 1], [], []>} : vector<8x8xbf16>, vector<8x384xbf16>, vector<8x384xf32> -> vector<8x384xf32>
    %24 = arith.addf %18, %23 : vector<8x384xf32>
    %c0_23 = arith.constant 0 : index
    %c0_24 = arith.constant 0 : index
    %c19 = arith.constant 19 : index
    %25 = vector.load %arg1[%c0_23, %c0_24, %c19] : memref<1x8x512xbf16, #tpu.memory_space<vmem>>, vector<1x8x384xbf16>
    %26 = vector.shape_cast %25 : vector<1x8x384xbf16> to vector<8x384xbf16>
    %c4 = arith.constant 4 : index
    %c0_25 = arith.constant 0 : index
    %c0_26 = arith.constant 0 : index
    %27 = vector.load %arg2[%c4, %c0_25, %c0_26] : memref<9x8x8xbf16, #tpu.memory_space<vmem>>, vector<1x8x8xbf16>
    %28 = vector.shape_cast %27 : vector<1x8x8xbf16> to vector<8x8xbf16>
    %cst_27 = arith.constant dense<0.000000e+00> : vector<8x384xf32>
    %29 = tpu.matmul %28, %26, %cst_27 {dimension_numbers = #tpu.dot_dimension_numbers<[1], [0], [0], [1], [0, 0, 1, 1], [], []>} : vector<8x8xbf16>, vector<8x384xbf16>, vector<8x384xf32> -> vector<8x384xf32>
    %30 = arith.addf %24, %29 : vector<8x384xf32>
    %c0_28 = arith.constant 0 : index
    %c0_29 = arith.constant 0 : index
    %c20 = arith.constant 20 : index
    %31 = vector.load %arg1[%c0_28, %c0_29, %c20] : memref<1x8x512xbf16, #tpu.memory_space<vmem>>, vector<1x8x384xbf16>
    %32 = vector.shape_cast %31 : vector<1x8x384xbf16> to vector<8x384xbf16>
    %c5 = arith.constant 5 : index
    %c0_30 = arith.constant 0 : index
    %c0_31 = arith.constant 0 : index
    %33 = vector.load %arg2[%c5, %c0_30, %c0_31] : memref<9x8x8xbf16, #tpu.memory_space<vmem>>, vector<1x8x8xbf16>
    %34 = vector.shape_cast %33 : vector<1x8x8xbf16> to vector<8x8xbf16>
    %cst_32 = arith.constant dense<0.000000e+00> : vector<8x384xf32>
    %35 = tpu.matmul %34, %32, %cst_32 {dimension_numbers = #tpu.dot_dimension_numbers<[1], [0], [0], [1], [0, 0, 1, 1], [], []>} : vector<8x8xbf16>, vector<8x384xbf16>, vector<8x384xf32> -> vector<8x384xf32>
    %36 = arith.addf %30, %35 : vector<8x384xf32>
    %c0_33 = arith.constant 0 : index
    %c0_34 = arith.constant 0 : index
    %c36 = arith.constant 36 : index
    %37 = vector.load %arg1[%c0_33, %c0_34, %c36] : memref<1x8x512xbf16, #tpu.memory_space<vmem>>, vector<1x8x384xbf16>
    %38 = vector.shape_cast %37 : vector<1x8x384xbf16> to vector<8x384xbf16>
    %c6 = arith.constant 6 : index
    %c0_35 = arith.constant 0 : index
    %c0_36 = arith.constant 0 : index
    %39 = vector.load %arg2[%c6, %c0_35, %c0_36] : memref<9x8x8xbf16, #tpu.memory_space<vmem>>, vector<1x8x8xbf16>
    %40 = vector.shape_cast %39 : vector<1x8x8xbf16> to vector<8x8xbf16>
    %cst_37 = arith.constant dense<0.000000e+00> : vector<8x384xf32>
    %41 = tpu.matmul %40, %38, %cst_37 {dimension_numbers = #tpu.dot_dimension_numbers<[1], [0], [0], [1], [0, 0, 1, 1], [], []>} : vector<8x8xbf16>, vector<8x384xbf16>, vector<8x384xf32> -> vector<8x384xf32>
    %42 = arith.addf %36, %41 : vector<8x384xf32>
    %c0_38 = arith.constant 0 : index
    %c0_39 = arith.constant 0 : index
    %c37 = arith.constant 37 : index
    %43 = vector.load %arg1[%c0_38, %c0_39, %c37] : memref<1x8x512xbf16, #tpu.memory_space<vmem>>, vector<1x8x384xbf16>
    %44 = vector.shape_cast %43 : vector<1x8x384xbf16> to vector<8x384xbf16>
    %c7 = arith.constant 7 : index
    %c0_40 = arith.constant 0 : index
    %c0_41 = arith.constant 0 : index
    %45 = vector.load %arg2[%c7, %c0_40, %c0_41] : memref<9x8x8xbf16, #tpu.memory_space<vmem>>, vector<1x8x8xbf16>
    %46 = vector.shape_cast %45 : vector<1x8x8xbf16> to vector<8x8xbf16>
    %cst_42 = arith.constant dense<0.000000e+00> : vector<8x384xf32>
    %47 = tpu.matmul %46, %44, %cst_42 {dimension_numbers = #tpu.dot_dimension_numbers<[1], [0], [0], [1], [0, 0, 1, 1], [], []>} : vector<8x8xbf16>, vector<8x384xbf16>, vector<8x384xf32> -> vector<8x384xf32>
    %48 = arith.addf %42, %47 : vector<8x384xf32>
    %c0_43 = arith.constant 0 : index
    %c0_44 = arith.constant 0 : index
    %c38 = arith.constant 38 : index
    %49 = vector.load %arg1[%c0_43, %c0_44, %c38] : memref<1x8x512xbf16, #tpu.memory_space<vmem>>, vector<1x8x384xbf16>
    %50 = vector.shape_cast %49 : vector<1x8x384xbf16> to vector<8x384xbf16>
    %c8 = arith.constant 8 : index
    %c0_45 = arith.constant 0 : index
    %c0_46 = arith.constant 0 : index
    %51 = vector.load %arg2[%c8, %c0_45, %c0_46] : memref<9x8x8xbf16, #tpu.memory_space<vmem>>, vector<1x8x8xbf16>
    %52 = vector.shape_cast %51 : vector<1x8x8xbf16> to vector<8x8xbf16>
    %cst_47 = arith.constant dense<0.000000e+00> : vector<8x384xf32>
    %53 = tpu.matmul %52, %50, %cst_47 {dimension_numbers = #tpu.dot_dimension_numbers<[1], [0], [0], [1], [0, 0, 1, 1], [], []>} : vector<8x8xbf16>, vector<8x384xbf16>, vector<8x384xf32> -> vector<8x384xf32>
    %54 = arith.addf %48, %53 : vector<8x384xf32>
    %c0_48 = arith.constant 0 : index
    %c0_49 = arith.constant 0 : index
    %55 = vector.load %arg3[%c0_48, %c0_49] : memref<8x1xf32, #tpu.memory_space<vmem>>, vector<8x1xf32>
    %56 = vector.broadcast %55 : vector<8x1xf32> to vector<8x384xf32>
    %57 = arith.addf %54, %56 : vector<8x384xf32>
    %cst_50 = arith.constant 0.000000e+00 : f32
    %58 = vector.broadcast %cst_50 : f32 to vector<8x384xf32>
    %59 = arith.maximumf %57, %58 : vector<8x384xf32>
    %c0_51 = arith.constant 0 : index
    %c0_52 = arith.constant 0 : index
    %c0_53 = arith.constant 0 : index
    %60 = vector.load %arg4[%c0_51, %c0_52, %c0_53] : memref<1x8x384xf32, #tpu.memory_space<vmem>>, vector<1x8x384xf32>
    %61 = vector.shape_cast %60 : vector<1x8x384xf32> to vector<8x384xf32>
    %62 = vector.shape_cast %59 : vector<8x384xf32> to vector<1x8x384xf32>
    tpu.vector_store %arg4[%c0_51, %c0_52, %c0_53], %62 {strides = array<i32>} : memref<1x8x384xf32, #tpu.memory_space<vmem>>, vector<1x8x384xf32>,
    return
  }
  func.func @transform_0(%arg0: i32) -> (i32, i32, i32) {
    %c0_i32 = arith.constant 0 : i32
    %c0_i32_0 = arith.constant 0 : i32
    %c0_i32_1 = arith.constant 0 : i32
    return %arg0, %c0_i32, %c0_i32_0 : i32, i32, i32
  }
  func.func @transform_1(%arg0: i32) -> (i32, i32, i32) {
    %c0_i32 = arith.constant 0 : i32
    %c0_i32_0 = arith.constant 0 : i32
    %c0_i32_1 = arith.constant 0 : i32
    %c0_i32_2 = arith.constant 0 : i32
    return %c0_i32, %c0_i32_0, %c0_i32_1 : i32, i32, i32
  }
  func.func @transform_2(%arg0: i32) -> (i32, i32) {
    %c0_i32 = arith.constant 0 : i32
    %c0_i32_0 = arith.constant 0 : i32
    %c0_i32_1 = arith.constant 0 : i32
    return %c0_i32, %c0_i32_0 : i32, i32
  }
  func.func @transform_3(%arg0: i32) -> (i32, i32, i32) {
    %c0_i32 = arith.constant 0 : i32
    %c0_i32_0 = arith.constant 0 : i32
    %c0_i32_1 = arith.constant 0 : i32
    return %arg0, %c0_i32, %c0_i32_0 : i32, i32, i32
  }
}

</mosaic_0001>

<llo_original>
// kernel: conv2d_bn_act.1
$region0: #{conv2d_bn_act.1}
  #allocation0 [shape = 'u32[]', space=smem, size = 0x4, offset = 0x4, fixed_abs, tag = 'smem constant byte address 0x4 - core index']
  #allocation1 [shape = 'u32[144,128]{1,0:T(1,128)}', space=vmem, size = 0x12000, scoped, tag = 'internal scratch']
  %s0 = inlined_call_operand.vmem [shape: bf16[2,8,512], index: 0, kind: input, shape index: {}]
  %s1 = inlined_call_operand.vmem [shape: bf16[9,8,8], index: 1, kind: input, shape index: {}]
  %s2 = inlined_call_operand.vmem [shape: f32[8,1], index: 2, kind: input, shape index: {}]
  %s3 = inlined_call_operand.vmem [shape: f32[2,8,384], index: 3, kind: output, shape index: {}]
  %s4 = sld [smem:[#allocation0]]
  $region45: #{conv2d_bn_act.1} parent=0
    _
  %s6 = ssub.s32 1, %s4
  %s7 = scalar_select 0, %s6, %s4
  loop: start=0, step=1, limit=4
  $region2: #{conv2d_bn_act.1} parent=0 // loop_pre_header
    _
  $region3: #{conv2d_bn_act.1} parent=0 // loop_header
    %s9 = sphi 0, %s13
    %p10 = scmp.ge.s32.totalorder %s9, 4
    %s19 = sphi 0, %s21
    %s22 = sphi 0, %s19
    %s23 = sphi 0, %s22
    %s39 = sphi 0, %s23
    %s43 = sphi 0, %s43
    %s45 = sphi 0, %s43
    %s46 = sphi 0, %s45
    %s60 = sphi 0, %s46
    %s64 = sphi 0, %s64
    %s66 = sphi 0, %s64
    %s67 = sphi 0, %s66
    %s81 = sphi 0, %s67
    %s87 = sphi 0, %s89
    %s90 = sphi 0, %s87
    %s91 = sphi 0, %s90
    %s107 = sphi 0, %s91
  $region4: #{conv2d_bn_act.1} parent=0 // loop_header_branch
    %12 = sbr.rel (%p10) target = $region8
  $region5: #{conv2d_bn_act.1} parent=0 // loop_body
    %s14 = ssub.s32 %s9, 1
    %s15 = ssub.s32 %s9, 2
    %s16 = sadd.s32 %s9, 1
    %s17 = ssub.s32 %s9, %s16
    %p18 = scmp.eq.s32.totalorder %s17, 0
    %s20 = sadd.s32 %s19, 1
    %s21 = scalar_select %p18, %s19, %s20
    %p24 = pneg %p18
    %p25 = scmp.eq.s32.totalorder %s9, 1
    %p26 = por %p24, %p25
    %p27 = scmp.ne.s32.totalorder %s19, %s22
    %p28 = scmp.eq.s32.totalorder %s9, 0
    %p29 = por %p27, %p28
    %p30 = scmp.ne.s32.totalorder %s19, %s22
    %p31 = scmp.eq.s32.totalorder %s14, 1
    %p32 = por %p30, %p31
    %p33 = scmp.ne.s32.totalorder %s22, %s23
    %p34 = scmp.eq.s32.totalorder %s14, 0
    %p35 = por %p33, %p34
    %p36 = scmp.ne.s32.totalorder %s22, %s23
    %p37 = scmp.eq.s32.totalorder %s15, 1
    %p38 = por %p36, %p37
    %p40 = scmp.ne.s32.totalorder %s23, %s39
    %p41 = scmp.eq.s32.totalorder %s15, 0
    %p42 = por %p40, %p41
    %s44 = sadd.s32 %s43, 1
    %p47 = scmp.eq.s32.totalorder %s9, 1
    %p48 = scmp.ne.s32.totalorder %s43, %s45
    %p49 = scmp.eq.s32.totalorder %s9, 0
    %p50 = por %p48, %p49
    %p51 = scmp.ne.s32.totalorder %s43, %s45
    %p52 = scmp.eq.s32.totalorder %s14, 1
    %p53 = por %p51, %p52
    %p54 = scmp.ne.s32.totalorder %s45, %s46
    %p55 = scmp.eq.s32.totalorder %s14, 0
    %p56 = por %p54, %p55
    %p57 = scmp.ne.s32.totalorder %s45, %s46
    %p58 = scmp.eq.s32.totalorder %s15, 1
    %p59 = por %p57, %p58
    %p61 = scmp.ne.s32.totalorder %s46, %s60
    %p62 = scmp.eq.s32.totalorder %s15, 0
    %p63 = por %p61, %p62
    %s65 = sadd.s32 %s64, 1
    %p68 = scmp.eq.s32.totalorder %s9, 1
    %p69 = scmp.ne.s32.totalorder %s64, %s66
    %p70 = scmp.eq.s32.totalorder %s9, 0
    %p71 = por %p69, %p70
    %p72 = scmp.ne.s32.totalorder %s64, %s66
    %p73 = scmp.eq.s32.totalorder %s14, 1
    %p74 = por %p72, %p73
    %p75 = scmp.ne.s32.totalorder %s66, %s67
    %p76 = scmp.eq.s32.totalorder %s14, 0
    %p77 = por %p75, %p76
    %p78 = scmp.ne.s32.totalorder %s66, %s67
    %p79 = scmp.eq.s32.totalorder %s15, 1
    %p80 = por %p78, %p79
    %p82 = scmp.ne.s32.totalorder %s67, %s81
    %p83 = scmp.eq.s32.totalorder %s15, 0
    %p84 = por %p82, %p83
    %s85 = ssub.s32 %s9, %s16
    %p86 = scmp.eq.s32.totalorder %s85, 0
    %s88 = sadd.s32 %s87, 1
    %s89 = scalar_select %p86, %s87, %s88
    %p92 = pneg %p86
    %p93 = scmp.eq.s32.totalorder %s9, 1
    %p94 = por %p92, %p93
    %p95 = scmp.ne.s32.totalorder %s87, %s90
    %p96 = scmp.eq.s32.totalorder %s9, 0
    %p97 = por %p95, %p96
    %p98 = scmp.ne.s32.totalorder %s87, %s90
    %p99 = scmp.eq.s32.totalorder %s14, 1
    %p100 = por %p98, %p99
    %p101 = scmp.ne.s32.totalorder %s90, %s91
    %p102 = scmp.eq.s32.totalorder %s14, 0
    %p103 = por %p101, %p102
    %p104 = scmp.ne.s32.totalorder %s90, %s91
    %p105 = scmp.eq.s32.totalorder %s15, 1
    %p106 = por %p104, %p105
    %p108 = scmp.ne.s32.totalorder %s91, %s107
    %p109 = scmp.eq.s32.totalorder %s15, 0
    %p110 = por %p108, %p109
    %p111 = scmp.le.s32.totalorder 1, %s9
    %p112 = scmp.lt.s32.totalorder %s9, 3
    %p113 = pnand %p111, %p112
    %p114 = pneg %p113
    // Predicated region
    $region9: #{conv2d_bn_act.1} parent=5 // pred_check
      _
    $region10: #{conv2d_bn_act.1} parent=5 // pred_check_branch
      %116 = sbr.rel (%p113) target = $region12
    $region11: #{conv2d_bn_act.1} parent=5 // pred_region
      %s117 = ssub.s32 %s9, 1
      // Predicated region
      $region13: #{conv2d_bn_act.1} parent=11 // pred_check
        %p118 = pneg %p56
      $region14: #{conv2d_bn_act.1} parent=11 // pred_check_branch
        %120 = sbr.rel (%p118) target = $region16
      $region15: #{conv2d_bn_act.1} parent=11 // pred_region
        _
      $region16: #{conv2d_bn_act.1} parent=11 // pred_fallthru
        _
      // Predicated region
      $region17: #{conv2d_bn_act.1} parent=11 // pred_check
        %p121 = pneg %p77
      $region18: #{conv2d_bn_act.1} parent=11 // pred_check_branch
        %123 = sbr.rel (%p121) target = $region20
      $region19: #{conv2d_bn_act.1} parent=11 // pred_region
        _
      $region20: #{conv2d_bn_act.1} parent=11 // pred_fallthru
        _
    $region12: #{conv2d_bn_act.1} parent=5 // pred_fallthru
      _
    %p124 = scmp.lt.s32.totalorder %s9, 2
    // Predicated region
    $region21: #{conv2d_bn_act.1} parent=5 // pred_check
      %p125 = pneg %p124
    $region22: #{conv2d_bn_act.1} parent=5 // pred_check_branch
      %127 = sbr.rel (%p125) target = $region24
    $region23: #{conv2d_bn_act.1} parent=5 // pred_region
      // Predicated region
      $region25: #{conv2d_bn_act.1} parent=23 // pred_check
        %p128 = pneg %p29
      $region26: #{conv2d_bn_act.1} parent=23 // pred_check_branch
        %130 = sbr.rel (%p128) target = $region28
      $region27: #{conv2d_bn_act.1} parent=23 // pred_region
        %p131 = scmp.lt.s32.totalorder %s9, 1
        %s132 = scalar_select %p131, %s9, 1
        %s133 = smul.addr %s132, 4
        %s134 = smul.addr %s133, 4
        %s135 = scalar_lea.vmem %s0, %s134
      $region28: #{conv2d_bn_act.1} parent=23 // pred_fallthru
        _
    $region24: #{conv2d_bn_act.1} parent=5 // pred_fallthru
      _
    %p136 = scmp.le.s32.totalorder 1, %s9
    %p137 = scmp.lt.s32.totalorder %s9, 3
    %p138 = pnand %p136, %p137
    %p139 = pneg %p138
    // Predicated region
    $region29: #{conv2d_bn_act.1} parent=5 // pred_check
      _
    $region30: #{conv2d_bn_act.1} parent=5 // pred_check_branch
      %141 = sbr.rel (%p138) target = $region32
    $region31: #{conv2d_bn_act.1} parent=5 // pred_region
      %s142 = ssub.s32 %s9, 1
      %p143 = scmp.lt.s32.totalorder %s14, 1
      %s144 = scalar_select %p143, %s14, 1
      %s145 = smul.addr %s144, 4
      %s146 = smul.addr %s145, 4
      %s147 = scalar_lea.vmem %s0, %s146
      %p148 = pneg %p35
      %p149 = pneg %p32
      %p150 = pneg %p56
      %p151 = pneg %p53
      %p152 = pneg %p77
      %p153 = pneg %p74
      %p154 = pneg %p103
      %p155 = pneg %p100
      %p156 = scmp.lt.s32.totalorder %s14, 1
      %s157 = scalar_select %p156, %s14, 1
      %s158 = smul.addr %s157, 3
      %s159 = smul.addr %s158, 8
      %s160 = scalar_lea.vmem %s3, %s159
      %p161 = scmp.lt.s32.totalorder %s14, 1
      %s162 = scalar_select %p161, %s14, 1
      %s163 = smul.addr %s162, 4
      %s164 = smul.addr %s163, 4
      %s165 = scalar_lea.vmem %s0, %s164
      %p166 = scmp.lt.s32.totalorder %s14, 1
      %s167 = scalar_select %p166, %s14, 1
      %s168 = smul.addr %s167, 3
      %s169 = smul.addr %s168, 8
      %s170 = scalar_lea.vmem %s3, %s169
      %v172 = vld [vmem:[%s165] sm:$0xff]
      %v173 = vld [vmem:[%s165 + $0x8] sm:$0xf]
      %v174 = vld [vmem:[%s1] sm:$0xf]
      %v175 = vld [vmem:[%s165] sm:$0xff]
      %v176 = vld [vmem:[%s165 + $0x8] sm:$0xff]
      %s177 = scalar_lea.vmem %s1, 4
      %v178 = vld [vmem:[%s177] sm:$0xf]
      %v181 = vunpack.c.l.b16 %v175
      %v182 = vunpack.c.h.b16 %v175
      %v183 = vunpack.c.l.b16 %v176
      %v184 = vunpack.c.h.b16 %v176
      %v185 = vpack.c.b16 %v181, %v181
      %v186 = vpack.c.b16 %v182, %v182
      %v187 = vpack.c.b16 %v183, %v183
      %v188 = vpack.c.b16 %v184, %v184
      %189 = vrot.lane.b32.xlu0 %v185, 127
      %v190 = vpop.permute.xlu0 %189
      %191 = vrot.lane.b32.xlu0 %v186, 127
      %v192 = vpop.permute.xlu0 %191
      %193 = vrot.lane.b32.xlu0 %v187, 127
      %v194 = vpop.permute.xlu0 %193
      %195 = vrot.lane.b32.xlu0 %v188, 127
      %v196 = vpop.permute.xlu0 %195
      %vm197 = vcmask 1039360
      %v198 = vsel %vm197, %v190, %v192
      %v199 = vsel %vm197, %v192, %v194
      %v200 = vsel %vm197, %v194, %v196
      %vm201 = vcmask 64512
      %v203 = vsel %vm201, %v178, 0
      %vm205 = vcmask 1043456
      %v207 = vsel %vm205, %v198, 0
      %v210 = vsel %vm205, %v199, 0
      %v213 = vsel %vm205, %v200, 0
      %215 = vmatprep.subr.bf16.mxu0 %v210
      %216 = vmatpush1.bf16.msra.mxu0 %v207
      %217 = vmatprep.subr.bf16.mxu0 0
      %218 = vmatpush1.bf16.msra.mxu0 0
      %219 = vmatprep.subr.bf16.mxu0 0
      %220 = vmatpush1.bf16.msra.mxu0 0
      %221 = vmatprep.subr.bf16.mxu0 0
      %222 = vmatpush1.bf16.msra.mxu0 0
      %223 = vmatprep.subr.bf16.mxu0 0
      %224 = vmatpush1.bf16.msra.mxu0 0
      %225 = vmatprep.subr.bf16.mxu0 0
      %226 = vmatpush1.bf16.msra.mxu0 0
      %227 = vmatprep.subr.bf16.mxu0 0
      %228 = vmatpush1.bf16.msra.mxu0 0
      %229 = vmatprep.subr.bf16.mxu0 0
      %230 = vmatpush1.bf16.msra.mxu0 0
      %231 = vmatprep.subr.bf16.mxu0 0
      %232 = vmatpush1.bf16.msra.mxu0 0
      %233 = vmatprep.subr.bf16.mxu0 0
      %234 = vmatpush1.bf16.msra.mxu0 0
      %235 = vmatprep.subr.bf16.mxu0 0
      %236 = vmatpush1.bf16.msra.mxu0 0
      %237 = vmatprep.subr.bf16.mxu0 0
      %238 = vmatpush1.bf16.msra.mxu0 0
      %239 = vmatprep.subr.bf16.mxu0 0
      %240 = vmatpush1.bf16.msra.mxu0 0
      %241 = vmatprep.subr.bf16.mxu0 0
      %242 = vmatpush1.bf16.msra.mxu0 0
      %243 = vmatprep.subr.bf16.mxu0 0
      %244 = vmatpush1.bf16.msra.mxu0 0
      %245 = vmatprep.subr.bf16.mxu0 0
      %246 = vmatpush1.bf16.msra.mxu0 0
      %247 = vmatprep.mubr.bf16.mxu0 0
      %248 = vmatmul.mubr.bf16.gmra.mrb[0].mxu0 %v203
      %v249 = vpop.f32.mrb[0].mxu0
      %v250 = vadd.f32 0.0, %v249
      %v251 = vpop.f32.mrb[0].mxu0
      %v252 = vadd.f32 0.0, %v251
      %v253 = vpop.f32.mrb[0].mxu0
      %v254 = vpop.f32.mrb[0].mxu0
      %255 = vdwg.mxu0
      %256 = vmatprep.subr.bf16.mxu0 0
      %257 = vmatpush1.bf16.msra.mxu0 %v213
      %258 = vmatprep.subr.bf16.mxu0 0
      %259 = vmatpush1.bf16.msra.mxu0 0
      %260 = vmatprep.subr.bf16.mxu0 0
      %261 = vmatpush1.bf16.msra.mxu0 0
      %262 = vmatprep.subr.bf16.mxu0 0
      %263 = vmatpush1.bf16.msra.mxu0 0
      %264 = vmatprep.subr.bf16.mxu0 0
      %265 = vmatpush1.bf16.msra.mxu0 0
      %266 = vmatprep.subr.bf16.mxu0 0
      %267 = vmatpush1.bf16.msra.mxu0 0
      %268 = vmatprep.subr.bf16.mxu0 0
      %269 = vmatpush1.bf16.msra.mxu0 0
      %270 = vmatprep.subr.bf16.mxu0 0
      %271 = vmatpush1.bf16.msra.mxu0 0
      %272 = vmatprep.subr.bf16.mxu0 0
      %273 = vmatpush1.bf16.msra.mxu0 0
      %274 = vmatprep.subr.bf16.mxu0 0
      %275 = vmatpush1.bf16.msra.mxu0 0
      %276 = vmatprep.subr.bf16.mxu0 0
      %277 = vmatpush1.bf16.msra.mxu0 0
      %278 = vmatprep.subr.bf16.mxu0 0
      %279 = vmatpush1.bf16.msra.mxu0 0
      %280 = vmatprep.subr.bf16.mxu0 0
      %281 = vmatpush1.bf16.msra.mxu0 0
      %282 = vmatprep.subr.bf16.mxu0 0
      %283 = vmatpush1.bf16.msra.mxu0 0
      %284 = vmatprep.subr.bf16.mxu0 0
      %285 = vmatpush1.bf16.msra.mxu0 0
      %286 = vmatprep.subr.bf16.mxu0 0
      %287 = vmatpush1.bf16.msra.mxu0 0
      %288 = vmatprep.mubr.bf16.mxu0 0
      %289 = vmatmul.mubr.bf16.gmra.mrb[0].mxu0 %v203
      %v290 = vpop.f32.mrb[0].mxu0
      %v291 = vadd.f32 0.0, %v290
      %v292 = vpop.f32.mrb[0].mxu0
      %v293 = vpop.f32.mrb[0].mxu0
      %v294 = vpop.f32.mrb[0].mxu0
      %295 = vdwg.mxu0
      %v298 = vunpack.c.l.b16 %v172
      %v299 = vunpack.c.h.b16 %v172
      %v300 = vunpack.c.l.b16 %v173
      %v301 = vpack.c.b16 %v298, %v298
      %v302 = vpack.c.b16 %v299, %v299
      %v303 = vpack.c.b16 %v300, %v300
      %v305 = vsel %vm201, %v174, 0
      %v308 = vsel %vm205, %v301, 0
      %v311 = vsel %vm205, %v302, 0
      %v314 = vsel %vm205, %v303, 0
      %316 = vmatprep.subr.bf16.mxu0 %v311
      %317 = vmatpush1.bf16.msra.mxu0 %v308
      %318 = vmatprep.subr.bf16.mxu0 0
      %319 = vmatpush1.bf16.msra.mxu0 0
      %320 = vmatprep.subr.bf16.mxu0 0
      %321 = vmatpush1.bf16.msra.mxu0 0
      %322 = vmatprep.subr.bf16.mxu0 0
      %323 = vmatpush1.bf16.msra.mxu0 0
      %324 = vmatprep.subr.bf16.mxu0 0
      %325 = vmatpush1.bf16.msra.mxu0 0
      %326 = vmatprep.subr.bf16.mxu0 0
      %327 = vmatpush1.bf16.msra.mxu0 0
      %328 = vmatprep.subr.bf16.mxu0 0
      %329 = vmatpush1.bf16.msra.mxu0 0
      %330 = vmatprep.subr.bf16.mxu0 0
      %331 = vmatpush1.bf16.msra.mxu0 0
      %332 = vmatprep.subr.bf16.mxu0 0
      %333 = vmatpush1.bf16.msra.mxu0 0
      %334 = vmatprep.subr.bf16.mxu0 0
      %335 = vmatpush1.bf16.msra.mxu0 0
      %336 = vmatprep.subr.bf16.mxu0 0
      %337 = vmatpush1.bf16.msra.mxu0 0
      %338 = vmatprep.subr.bf16.mxu0 0
      %339 = vmatpush1.bf16.msra.mxu0 0
      %340 = vmatprep.subr.bf16.mxu0 0
      %341 = vmatpush1.bf16.msra.mxu0 0
      %342 = vmatprep.subr.bf16.mxu0 0
      %343 = vmatpush1.bf16.msra.mxu0 0
      %344 = vmatprep.subr.bf16.mxu0 0
      %345 = vmatpush1.bf16.msra.mxu0 0
      %346 = vmatprep.subr.bf16.mxu0 0
      %347 = vmatpush1.bf16.msra.mxu0 0
      %348 = vmatprep.mubr.bf16.mxu0 0
      %349 = vmatmul.mubr.bf16.gmra.mrb[0].mxu0 %v305
      %v350 = vpop.f32.mrb[0].mxu0
      %v351 = vadd.f32 %v250, %v350
      %v352 = vpop.f32.mrb[0].mxu0
      %v353 = vadd.f32 %v252, %v352
      %v354 = vpop.f32.mrb[0].mxu0
      %v355 = vpop.f32.mrb[0].mxu0
      %356 = vdwg.mxu0
      %357 = vmatprep.subr.bf16.mxu0 0
      %358 = vmatpush1.bf16.msra.mxu0 %v314
      %359 = vmatprep.subr.bf16.mxu0 0
      %360 = vmatpush1.bf16.msra.mxu0 0
      %361 = vmatprep.subr.bf16.mxu0 0
      %362 = vmatpush1.bf16.msra.mxu0 0
      %363 = vmatprep.subr.bf16.mxu0 0
      %364 = vmatpush1.bf16.msra.mxu0 0
      %365 = vmatprep.subr.bf16.mxu0 0
      %366 = vmatpush1.bf16.msra.mxu0 0
      %367 = vmatprep.subr.bf16.mxu0 0
      %368 = vmatpush1.bf16.msra.mxu0 0
      %369 = vmatprep.subr.bf16.mxu0 0
      %370 = vmatpush1.bf16.msra.mxu0 0
      %371 = vmatprep.subr.bf16.mxu0 0
      %372 = vmatpush1.bf16.msra.mxu0 0
      %373 = vmatprep.subr.bf16.mxu0 0
      %374 = vmatpush1.bf16.msra.mxu0 0
      %375 = vmatprep.subr.bf16.mxu0 0
      %376 = vmatpush1.bf16.msra.mxu0 0
      %377 = vmatprep.subr.bf16.mxu0 0
      %378 = vmatpush1.bf16.msra.mxu0 0
      %379 = vmatprep.subr.bf16.mxu0 0
      %380 = vmatpush1.bf16.msra.mxu0 0
      %381 = vmatprep.subr.bf16.mxu0 0
      %382 = vmatpush1.bf16.msra.mxu0 0
      %383 = vmatprep.subr.bf16.mxu0 0
      %384 = vmatpush1.bf16.msra.mxu0 0
      %385 = vmatprep.subr.bf16.mxu0 0
      %386 = vmatpush1.bf16.msra.mxu0 0
      %387 = vmatprep.subr.bf16.mxu0 0
      %388 = vmatpush1.bf16.msra.mxu0 0
      %389 = vmatprep.mubr.bf16.mxu0 0
      %390 = vmatmul.mubr.bf16.gmra.mrb[0].mxu0 %v305
      %v391 = vpop.f32.mrb[0].mxu0
      %v392 = vadd.f32 %v291, %v391
      %v393 = vpop.f32.mrb[0].mxu0
      %v394 = vpop.f32.mrb[0].mxu0
      %v395 = vpop.f32.mrb[0].mxu0
      %396 = vdwg.mxu0
      %s397 = scalar_lea.vmem %s1, 8
      %v398 = vld [vmem:[%s397] sm:$0xf]
      %399 = vrot.lane.b32.xlu0 %v185, 126
      %v400 = vpop.permute.xlu0 %399
      %401 = vrot.lane.b32.xlu0 %v186, 126
      %v402 = vpop.permute.xlu0 %401
      %403 = vrot.lane.b32.xlu0 %v187, 126
      %v404 = vpop.permute.xlu0 %403
      %405 = vrot.lane.b32.xlu0 %v188, 126
      %v406 = vpop.permute.xlu0 %405
      %vm407 = vcmask 1031168
      %v408 = vsel %vm407, %v400, %v402
      %v409 = vsel %vm407, %v402, %v404
      %v410 = vsel %vm407, %v404, %v406
      %v412 = vsel %vm201, %v398, 0
      %v415 = vsel %vm205, %v408, 0
      %v418 = vsel %vm205, %v409, 0
      %v421 = vsel %vm205, %v410, 0
      %423 = vmatprep.subr.bf16.mxu0 %v418
      %424 = vmatpush1.bf16.msra.mxu0 %v415
      %425 = vmatprep.subr.bf16.mxu0 0
      %426 = vmatpush1.bf16.msra.mxu0 0
      %427 = vmatprep.subr.bf16.mxu0 0
      %428 = vmatpush1.bf16.msra.mxu0 0
      %429 = vmatprep.subr.bf16.mxu0 0
      %430 = vmatpush1.bf16.msra.mxu0 0
      %431 = vmatprep.subr.bf16.mxu0 0
      %432 = vmatpush1.bf16.msra.mxu0 0
      %433 = vmatprep.subr.bf16.mxu0 0
      %434 = vmatpush1.bf16.msra.mxu0 0
      %435 = vmatprep.subr.bf16.mxu0 0
      %436 = vmatpush1.bf16.msra.mxu0 0
      %437 = vmatprep.subr.bf16.mxu0 0
      %438 = vmatpush1.bf16.msra.mxu0 0
      %439 = vmatprep.subr.bf16.mxu0 0
      %440 = vmatpush1.bf16.msra.mxu0 0
      %441 = vmatprep.subr.bf16.mxu0 0
      %442 = vmatpush1.bf16.msra.mxu0 0
      %443 = vmatprep.subr.bf16.mxu0 0
      %444 = vmatpush1.bf16.msra.mxu0 0
      %445 = vmatprep.subr.bf16.mxu0 0
      %446 = vmatpush1.bf16.msra.mxu0 0
      %447 = vmatprep.subr.bf16.mxu0 0
      %448 = vmatpush1.bf16.msra.mxu0 0
      %449 = vmatprep.subr.bf16.mxu0 0
      %450 = vmatpush1.bf16.msra.mxu0 0
      %451 = vmatprep.subr.bf16.mxu0 0
      %452 = vmatpush1.bf16.msra.mxu0 0
      %453 = vmatprep.subr.bf16.mxu0 0
      %454 = vmatpush1.bf16.msra.mxu0 0
      %455 = vmatprep.mubr.bf16.mxu0 0
      %456 = vmatmul.mubr.bf16.gmra.mrb[0].mxu0 %v412
      %v457 = vpop.f32.mrb[0].mxu0
      %v458 = vadd.f32 0.0, %v457
      %v459 = vpop.f32.mrb[0].mxu0
      %v460 = vadd.f32 0.0, %v459
      %v461 = vpop.f32.mrb[0].mxu0
      %v462 = vpop.f32.mrb[0].mxu0
      %463 = vdwg.mxu0
      %464 = vmatprep.subr.bf16.mxu0 0
      %465 = vmatpush1.bf16.msra.mxu0 %v421
      %466 = vmatprep.subr.bf16.mxu0 0
      %467 = vmatpush1.bf16.msra.mxu0 0
      %468 = vmatprep.subr.bf16.mxu0 0
      %469 = vmatpush1.bf16.msra.mxu0 0
      %470 = vmatprep.subr.bf16.mxu0 0
      %471 = vmatpush1.bf16.msra.mxu0 0
      %472 = vmatprep.subr.bf16.mxu0 0
      %473 = vmatpush1.bf16.msra.mxu0 0
      %474 = vmatprep.subr.bf16.mxu0 0
      %475 = vmatpush1.bf16.msra.mxu0 0
      %476 = vmatprep.subr.bf16.mxu0 0
      %477 = vmatpush1.bf16.msra.mxu0 0
      %478 = vmatprep.subr.bf16.mxu0 0
      %479 = vmatpush1.bf16.msra.mxu0 0
      %480 = vmatprep.subr.bf16.mxu0 0
      %481 = vmatpush1.bf16.msra.mxu0 0
      %482 = vmatprep.subr.bf16.mxu0 0
      %483 = vmatpush1.bf16.msra.mxu0 0
      %484 = vmatprep.subr.bf16.mxu0 0
      %485 = vmatpush1.bf16.msra.mxu0 0
      %486 = vmatprep.subr.bf16.mxu0 0
      %487 = vmatpush1.bf16.msra.mxu0 0
      %488 = vmatprep.subr.bf16.mxu0 0
      %489 = vmatpush1.bf16.msra.mxu0 0
      %490 = vmatprep.subr.bf16.mxu0 0
      %491 = vmatpush1.bf16.msra.mxu0 0
      %492 = vmatprep.subr.bf16.mxu0 0
      %493 = vmatpush1.bf16.msra.mxu0 0
      %494 = vmatprep.subr.bf16.mxu0 0
      %495 = vmatpush1.bf16.msra.mxu0 0
      %496 = vmatprep.mubr.bf16.mxu0 0
      %497 = vmatmul.mubr.bf16.gmra.mrb[0].mxu0 %v412
      %v498 = vpop.f32.mrb[0].mxu0
      %v499 = vadd.f32 0.0, %v498
      %v500 = vpop.f32.mrb[0].mxu0
      %v501 = vpop.f32.mrb[0].mxu0
      %v502 = vpop.f32.mrb[0].mxu0
      %503 = vdwg.mxu0
      %v504 = vadd.f32 %v351, %v458
      %v505 = vadd.f32 %v353, %v460
      %v506 = vadd.f32 %v392, %v499
      %s507 = scalar_lea.vmem %s1, 12
      %v508 = vld [vmem:[%s507] sm:$0xf]
      %509 = vrot.lane.b32.xlu0 %v185, 110
      %v510 = vpop.permute.xlu0 %509
      %511 = vrot.lane.b32.xlu0 %v186, 110
      %v512 = vpop.permute.xlu0 %511
      %513 = vrot.lane.b32.xlu0 %v187, 110
      %v514 = vpop.permute.xlu0 %513
      %515 = vrot.lane.b32.xlu0 %v188, 110
      %v516 = vpop.permute.xlu0 %515
      %vm517 = vcmask 900096
      %v518 = vsel %vm517, %v510, %v512
      %v519 = vsel %vm517, %v512, %v514
      %v520 = vsel %vm517, %v514, %v516
      %v522 = vsel %vm201, %v508, 0
      %v525 = vsel %vm205, %v518, 0
      %v528 = vsel %vm205, %v519, 0
      %v531 = vsel %vm205, %v520, 0
      %533 = vmatprep.subr.bf16.mxu0 %v528
      %534 = vmatpush1.bf16.msra.mxu0 %v525
      %535 = vmatprep.subr.bf16.mxu0 0
      %536 = vmatpush1.bf16.msra.mxu0 0
      %537 = vmatprep.subr.bf16.mxu0 0
      %538 = vmatpush1.bf16.msra.mxu0 0
      %539 = vmatprep.subr.bf16.mxu0 0
      %540 = vmatpush1.bf16.msra.mxu0 0
      %541 = vmatprep.subr.bf16.mxu0 0
      %542 = vmatpush1.bf16.msra.mxu0 0
      %543 = vmatprep.subr.bf16.mxu0 0
      %544 = vmatpush1.bf16.msra.mxu0 0
      %545 = vmatprep.subr.bf16.mxu0 0
      %546 = vmatpush1.bf16.msra.mxu0 0
      %547 = vmatprep.subr.bf16.mxu0 0
      %548 = vmatpush1.bf16.msra.mxu0 0
      %549 = vmatprep.subr.bf16.mxu0 0
      %550 = vmatpush1.bf16.msra.mxu0 0
      %551 = vmatprep.subr.bf16.mxu0 0
      %552 = vmatpush1.bf16.msra.mxu0 0
      %553 = vmatprep.subr.bf16.mxu0 0
      %554 = vmatpush1.bf16.msra.mxu0 0
      %555 = vmatprep.subr.bf16.mxu0 0
      %556 = vmatpush1.bf16.msra.mxu0 0
      %557 = vmatprep.subr.bf16.mxu0 0
      %558 = vmatpush1.bf16.msra.mxu0 0
      %559 = vmatprep.subr.bf16.mxu0 0
      %560 = vmatpush1.bf16.msra.mxu0 0
      %561 = vmatprep.subr.bf16.mxu0 0
      %562 = vmatpush1.bf16.msra.mxu0 0
      %563 = vmatprep.subr.bf16.mxu0 0
      %564 = vmatpush1.bf16.msra.mxu0 0
      %565 = vmatprep.mubr.bf16.mxu0 0
      %566 = vmatmul.mubr.bf16.gmra.mrb[0].mxu0 %v522
      %v567 = vpop.f32.mrb[0].mxu0
      %v568 = vadd.f32 0.0, %v567
      %v569 = vpop.f32.mrb[0].mxu0
      %v570 = vadd.f32 0.0, %v569
      %v571 = vpop.f32.mrb[0].mxu0
      %v572 = vpop.f32.mrb[0].mxu0
      %573 = vdwg.mxu0
      %574 = vmatprep.subr.bf16.mxu0 0
      %575 = vmatpush1.bf16.msra.mxu0 %v531
      %576 = vmatprep.subr.bf16.mxu0 0
      %577 = vmatpush1.bf16.msra.mxu0 0
      %578 = vmatprep.subr.bf16.mxu0 0
      %579 = vmatpush1.bf16.msra.mxu0 0
      %580 = vmatprep.subr.bf16.mxu0 0
      %581 = vmatpush1.bf16.msra.mxu0 0
      %582 = vmatprep.subr.bf16.mxu0 0
      %583 = vmatpush1.bf16.msra.mxu0 0
      %584 = vmatprep.subr.bf16.mxu0 0
      %585 = vmatpush1.bf16.msra.mxu0 0
      %586 = vmatprep.subr.bf16.mxu0 0
      %587 = vmatpush1.bf16.msra.mxu0 0
      %588 = vmatprep.subr.bf16.mxu0 0
      %589 = vmatpush1.bf16.msra.mxu0 0
      %590 = vmatprep.subr.bf16.mxu0 0
      %591 = vmatpush1.bf16.msra.mxu0 0
      %592 = vmatprep.subr.bf16.mxu0 0
      %593 = vmatpush1.bf16.msra.mxu0 0
      %594 = vmatprep.subr.bf16.mxu0 0
      %595 = vmatpush1.bf16.msra.mxu0 0
      %596 = vmatprep.subr.bf16.mxu0 0
      %597 = vmatpush1.bf16.msra.mxu0 0
      %598 = vmatprep.subr.bf16.mxu0 0
      %599 = vmatpush1.bf16.msra.mxu0 0
      %600 = vmatprep.subr.bf16.mxu0 0
      %601 = vmatpush1.bf16.msra.mxu0 0
      %602 = vmatprep.subr.bf16.mxu0 0
      %603 = vmatpush1.bf16.msra.mxu0 0
      %604 = vmatprep.subr.bf16.mxu0 0
      %605 = vmatpush1.bf16.msra.mxu0 0
      %606 = vmatprep.mubr.bf16.mxu0 0
      %607 = vmatmul.mubr.bf16.gmra.mrb[0].mxu0 %v522
      %v608 = vpop.f32.mrb[0].mxu0
      %v609 = vadd.f32 0.0, %v608
      %v610 = vpop.f32.mrb[0].mxu0
      %v611 = vpop.f32.mrb[0].mxu0
      %v612 = vpop.f32.mrb[0].mxu0
      %613 = vdwg.mxu0
      %v614 = vadd.f32 %v504, %v568
      %v615 = vadd.f32 %v505, %v570
      %v616 = vadd.f32 %v506, %v609
      %s617 = scalar_lea.vmem %s1, 16
      %v618 = vld [vmem:[%s617] sm:$0xf]
      %619 = vrot.lane.b32.xlu0 %v185, 109
      %v620 = vpop.permute.xlu0 %619
      %621 = vrot.lane.b32.xlu0 %v186, 109
      %v622 = vpop.permute.xlu0 %621
      %623 = vrot.lane.b32.xlu0 %v187, 109
      %v624 = vpop.permute.xlu0 %623
      %625 = vrot.lane.b32.xlu0 %v188, 109
      %v626 = vpop.permute.xlu0 %625
      %vm627 = vcmask 891904
      %v628 = vsel %vm627, %v620, %v622
      %v629 = vsel %vm627, %v622, %v624
      %v630 = vsel %vm627, %v624, %v626
      %v632 = vsel %vm201, %v618, 0
      %v635 = vsel %vm205, %v628, 0
      %v638 = vsel %vm205, %v629, 0
      %v641 = vsel %vm205, %v630, 0
      %643 = vmatprep.subr.bf16.mxu0 %v638
      %644 = vmatpush1.bf16.msra.mxu0 %v635
      %645 = vmatprep.subr.bf16.mxu0 0
      %646 = vmatpush1.bf16.msra.mxu0 0
      %647 = vmatprep.subr.bf16.mxu0 0
      %648 = vmatpush1.bf16.msra.mxu0 0
      %649 = vmatprep.subr.bf16.mxu0 0
      %650 = vmatpush1.bf16.msra.mxu0 0
      %651 = vmatprep.subr.bf16.mxu0 0
      %652 = vmatpush1.bf16.msra.mxu0 0
      %653 = vmatprep.subr.bf16.mxu0 0
      %654 = vmatpush1.bf16.msra.mxu0 0
      %655 = vmatprep.subr.bf16.mxu0 0
      %656 = vmatpush1.bf16.msra.mxu0 0
      %657 = vmatprep.subr.bf16.mxu0 0
      %658 = vmatpush1.bf16.msra.mxu0 0
      %659 = vmatprep.subr.bf16.mxu0 0
      %660 = vmatpush1.bf16.msra.mxu0 0
      %661 = vmatprep.subr.bf16.mxu0 0
      %662 = vmatpush1.bf16.msra.mxu0 0
      %663 = vmatprep.subr.bf16.mxu0 0
      %664 = vmatpush1.bf16.msra.mxu0 0
      %665 = vmatprep.subr.bf16.mxu0 0
      %666 = vmatpush1.bf16.msra.mxu0 0
      %667 = vmatprep.subr.bf16.mxu0 0
      %668 = vmatpush1.bf16.msra.mxu0 0
      %669 = vmatprep.subr.bf16.mxu0 0
      %670 = vmatpush1.bf16.msra.mxu0 0
      %671 = vmatprep.subr.bf16.mxu0 0
      %672 = vmatpush1.bf16.msra.mxu0 0
      %673 = vmatprep.subr.bf16.mxu0 0
      %674 = vmatpush1.bf16.msra.mxu0 0
      %675 = vmatprep.mubr.bf16.mxu0 0
      %676 = vmatmul.mubr.bf16.gmra.mrb[0].mxu0 %v632
      %v677 = vpop.f32.mrb[0].mxu0
      %v678 = vadd.f32 0.0, %v677
      %v679 = vpop.f32.mrb[0].mxu0
      %v680 = vadd.f32 0.0, %v679
      %v681 = vpop.f32.mrb[0].mxu0
      %v682 = vpop.f32.mrb[0].mxu0
      %683 = vdwg.mxu0
      %684 = vmatprep.subr.bf16.mxu0 0
      %685 = vmatpush1.bf16.msra.mxu0 %v641
      %686 = vmatprep.subr.bf16.mxu0 0
      %687 = vmatpush1.bf16.msra.mxu0 0
      %688 = vmatprep.subr.bf16.mxu0 0
      %689 = vmatpush1.bf16.msra.mxu0 0
      %690 = vmatprep.subr.bf16.mxu0 0
      %691 = vmatpush1.bf16.msra.mxu0 0
      %692 = vmatprep.subr.bf16.mxu0 0
      %693 = vmatpush1.bf16.msra.mxu0 0
      %694 = vmatprep.subr.bf16.mxu0 0
      %695 = vmatpush1.bf16.msra.mxu0 0
      %696 = vmatprep.subr.bf16.mxu0 0
      %697 = vmatpush1.bf16.msra.mxu0 0
      %698 = vmatprep.subr.bf16.mxu0 0
      %699 = vmatpush1.bf16.msra.mxu0 0
      %700 = vmatprep.subr.bf16.mxu0 0
      %701 = vmatpush1.bf16.msra.mxu0 0
      %702 = vmatprep.subr.bf16.mxu0 0
      %703 = vmatpush1.bf16.msra.mxu0 0
      %704 = vmatprep.subr.bf16.mxu0 0
      %705 = vmatpush1.bf16.msra.mxu0 0
      %706 = vmatprep.subr.bf16.mxu0 0
      %707 = vmatpush1.bf16.msra.mxu0 0
      %708 = vmatprep.subr.bf16.mxu0 0
      %709 = vmatpush1.bf16.msra.mxu0 0
      %710 = vmatprep.subr.bf16.mxu0 0
      %711 = vmatpush1.bf16.msra.mxu0 0
      %712 = vmatprep.subr.bf16.mxu0 0
      %713 = vmatpush1.bf16.msra.mxu0 0
      %714 = vmatprep.subr.bf16.mxu0 0
      %715 = vmatpush1.bf16.msra.mxu0 0
      %716 = vmatprep.mubr.bf16.mxu0 0
      %717 = vmatmul.mubr.bf16.gmra.mrb[0].mxu0 %v632
      %v718 = vpop.f32.mrb[0].mxu0
      %v719 = vadd.f32 0.0, %v718
      %v720 = vpop.f32.mrb[0].mxu0
      %v721 = vpop.f32.mrb[0].mxu0
      %v722 = vpop.f32.mrb[0].mxu0
      %723 = vdwg.mxu0
      %v724 = vadd.f32 %v614, %v678
      %v725 = vadd.f32 %v615, %v680
      %v726 = vadd.f32 %v616, %v719
      %s727 = scalar_lea.vmem %s1, 20
      %v728 = vld [vmem:[%s727] sm:$0xf]
      %729 = vrot.lane.b32.xlu0 %v185, 108
      %v730 = vpop.permute.xlu0 %729
      %731 = vrot.lane.b32.xlu0 %v186, 108
      %v732 = vpop.permute.xlu0 %731
      %733 = vrot.lane.b32.xlu0 %v187, 108
      %v734 = vpop.permute.xlu0 %733
      %735 = vrot.lane.b32.xlu0 %v188, 108
      %v736 = vpop.permute.xlu0 %735
      %vm737 = vcmask 883712
      %v738 = vsel %vm737, %v730, %v732
      %v739 = vsel %vm737, %v732, %v734
      %v740 = vsel %vm737, %v734, %v736
      %v742 = vsel %vm201, %v728, 0
      %v745 = vsel %vm205, %v738, 0
      %v748 = vsel %vm205, %v739, 0
      %v751 = vsel %vm205, %v740, 0
      %753 = vmatprep.subr.bf16.mxu0 %v748
      %754 = vmatpush1.bf16.msra.mxu0 %v745
      %755 = vmatprep.subr.bf16.mxu0 0
      %756 = vmatpush1.bf16.msra.mxu0 0
      %757 = vmatprep.subr.bf16.mxu0 0
      %758 = vmatpush1.bf16.msra.mxu0 0
      %759 = vmatprep.subr.bf16.mxu0 0
      %760 = vmatpush1.bf16.msra.mxu0 0
      %761 = vmatprep.subr.bf16.mxu0 0
      %762 = vmatpush1.bf16.msra.mxu0 0
      %763 = vmatprep.subr.bf16.mxu0 0
      %764 = vmatpush1.bf16.msra.mxu0 0
      %765 = vmatprep.subr.bf16.mxu0 0
      %766 = vmatpush1.bf16.msra.mxu0 0
      %767 = vmatprep.subr.bf16.mxu0 0
      %768 = vmatpush1.bf16.msra.mxu0 0
      %769 = vmatprep.subr.bf16.mxu0 0
      %770 = vmatpush1.bf16.msra.mxu0 0
      %771 = vmatprep.subr.bf16.mxu0 0
      %772 = vmatpush1.bf16.msra.mxu0 0
      %773 = vmatprep.subr.bf16.mxu0 0
      %774 = vmatpush1.bf16.msra.mxu0 0
      %775 = vmatprep.subr.bf16.mxu0 0
      %776 = vmatpush1.bf16.msra.mxu0 0
      %777 = vmatprep.subr.bf16.mxu0 0
      %778 = vmatpush1.bf16.msra.mxu0 0
      %779 = vmatprep.subr.bf16.mxu0 0
      %780 = vmatpush1.bf16.msra.mxu0 0
      %781 = vmatprep.subr.bf16.mxu0 0
      %782 = vmatpush1.bf16.msra.mxu0 0
      %783 = vmatprep.subr.bf16.mxu0 0
      %784 = vmatpush1.bf16.msra.mxu0 0
      %785 = vmatprep.mubr.bf16.mxu0 0
      %786 = vmatmul.mubr.bf16.gmra.mrb[0].mxu0 %v742
      %v787 = vpop.f32.mrb[0].mxu0
      %v788 = vadd.f32 0.0, %v787
      %v789 = vpop.f32.mrb[0].mxu0
      %v790 = vadd.f32 0.0, %v789
      %v791 = vpop.f32.mrb[0].mxu0
      %v792 = vpop.f32.mrb[0].mxu0
      %793 = vdwg.mxu0
      %794 = vmatprep.subr.bf16.mxu0 0
      %795 = vmatpush1.bf16.msra.mxu0 %v751
      %796 = vmatprep.subr.bf16.mxu0 0
      %797 = vmatpush1.bf16.msra.mxu0 0
      %798 = vmatprep.subr.bf16.mxu0 0
      %799 = vmatpush1.bf16.msra.mxu0 0
      %800 = vmatprep.subr.bf16.mxu0 0
      %801 = vmatpush1.bf16.msra.mxu0 0
      %802 = vmatprep.subr.bf16.mxu0 0
      %803 = vmatpush1.bf16.msra.mxu0 0
      %804 = vmatprep.subr.bf16.mxu0 0
      %805 = vmatpush1.bf16.msra.mxu0 0
      %806 = vmatprep.subr.bf16.mxu0 0
      %807 = vmatpush1.bf16.msra.mxu0 0
      %808 = vmatprep.subr.bf16.mxu0 0
      %809 = vmatpush1.bf16.msra.mxu0 0
      %810 = vmatprep.subr.bf16.mxu0 0
      %811 = vmatpush1.bf16.msra.mxu0 0
      %812 = vmatprep.subr.bf16.mxu0 0
      %813 = vmatpush1.bf16.msra.mxu0 0
      %814 = vmatprep.subr.bf16.mxu0 0
      %815 = vmatpush1.bf16.msra.mxu0 0
      %816 = vmatprep.subr.bf16.mxu0 0
      %817 = vmatpush1.bf16.msra.mxu0 0
      %818 = vmatprep.subr.bf16.mxu0 0
      %819 = vmatpush1.bf16.msra.mxu0 0
      %820 = vmatprep.subr.bf16.mxu0 0
      %821 = vmatpush1.bf16.msra.mxu0 0
      %822 = vmatprep.subr.bf16.mxu0 0
      %823 = vmatpush1.bf16.msra.mxu0 0
      %824 = vmatprep.subr.bf16.mxu0 0
      %825 = vmatpush1.bf16.msra.mxu0 0
      %826 = vmatprep.mubr.bf16.mxu0 0
      %827 = vmatmul.mubr.bf16.gmra.mrb[0].mxu0 %v742
      %v828 = vpop.f32.mrb[0].mxu0
      %v829 = vadd.f32 0.0, %v828
      %v830 = vpop.f32.mrb[0].mxu0
      %v831 = vpop.f32.mrb[0].mxu0
      %v832 = vpop.f32.mrb[0].mxu0
      %833 = vdwg.mxu0
      %v834 = vadd.f32 %v724, %v788
      %v835 = vadd.f32 %v725, %v790
      %v836 = vadd.f32 %v726, %v829
      %s837 = scalar_lea.vmem %s1, 24
      %v838 = vld [vmem:[%s837] sm:$0xf]
      %839 = vrot.lane.b32.xlu0 %v185, 92
      %v840 = vpop.permute.xlu0 %839
      %841 = vrot.lane.b32.xlu0 %v186, 92
      %v842 = vpop.permute.xlu0 %841
      %843 = vrot.lane.b32.xlu0 %v187, 92
      %v844 = vpop.permute.xlu0 %843
      %845 = vrot.lane.b32.xlu0 %v188, 92
      %v846 = vpop.permute.xlu0 %845
      %vm847 = vcmask 752640
      %v848 = vsel %vm847, %v840, %v842
      %v849 = vsel %vm847, %v842, %v844
      %v850 = vsel %vm847, %v844, %v846
      %v852 = vsel %vm201, %v838, 0
      %v855 = vsel %vm205, %v848, 0
      %v858 = vsel %vm205, %v849, 0
      %v861 = vsel %vm205, %v850, 0
      %863 = vmatprep.subr.bf16.mxu0 %v858
      %864 = vmatpush1.bf16.msra.mxu0 %v855
      %865 = vmatprep.subr.bf16.mxu0 0
      %866 = vmatpush1.bf16.msra.mxu0 0
      %867 = vmatprep.subr.bf16.mxu0 0
      %868 = vmatpush1.bf16.msra.mxu0 0
      %869 = vmatprep.subr.bf16.mxu0 0
      %870 = vmatpush1.bf16.msra.mxu0 0
      %871 = vmatprep.subr.bf16.mxu0 0
      %872 = vmatpush1.bf16.msra.mxu0 0
      %873 = vmatprep.subr.bf16.mxu0 0
      %874 = vmatpush1.bf16.msra.mxu0 0
      %875 = vmatprep.subr.bf16.mxu0 0
      %876 = vmatpush1.bf16.msra.mxu0 0
      %877 = vmatprep.subr.bf16.mxu0 0
      %878 = vmatpush1.bf16.msra.mxu0 0
      %879 = vmatprep.subr.bf16.mxu0 0
      %880 = vmatpush1.bf16.msra.mxu0 0
      %881 = vmatprep.subr.bf16.mxu0 0
      %882 = vmatpush1.bf16.msra.mxu0 0
      %883 = vmatprep.subr.bf16.mxu0 0
      %884 = vmatpush1.bf16.msra.mxu0 0
      %885 = vmatprep.subr.bf16.mxu0 0
      %886 = vmatpush1.bf16.msra.mxu0 0
      %887 = vmatprep.subr.bf16.mxu0 0
      %888 = vmatpush1.bf16.msra.mxu0 0
      %889 = vmatprep.subr.bf16.mxu0 0
      %890 = vmatpush1.bf16.msra.mxu0 0
      %891 = vmatprep.subr.bf16.mxu0 0
      %892 = vmatpush1.bf16.msra.mxu0 0
      %893 = vmatprep.subr.bf16.mxu0 0
      %894 = vmatpush1.bf16.msra.mxu0 0
      %895 = vmatprep.mubr.bf16.mxu0 0
      %896 = vmatmul.mubr.bf16.gmra.mrb[0].mxu0 %v852
      %v897 = vpop.f32.mrb[0].mxu0
      %v898 = vadd.f32 0.0, %v897
      %v899 = vpop.f32.mrb[0].mxu0
      %v900 = vadd.f32 0.0, %v899
      %v901 = vpop.f32.mrb[0].mxu0
      %v902 = vpop.f32.mrb[0].mxu0
      %903 = vdwg.mxu0
      %904 = vmatprep.subr.bf16.mxu0 0
      %905 = vmatpush1.bf16.msra.mxu0 %v861
      %906 = vmatprep.subr.bf16.mxu0 0
      %907 = vmatpush1.bf16.msra.mxu0 0
      %908 = vmatprep.subr.bf16.mxu0 0
      %909 = vmatpush1.bf16.msra.mxu0 0
      %910 = vmatprep.subr.bf16.mxu0 0
      %911 = vmatpush1.bf16.msra.mxu0 0
      %912 = vmatprep.subr.bf16.mxu0 0
      %913 = vmatpush1.bf16.msra.mxu0 0
      %914 = vmatprep.subr.bf16.mxu0 0
      %915 = vmatpush1.bf16.msra.mxu0 0
      %916 = vmatprep.subr.bf16.mxu0 0
      %917 = vmatpush1.bf16.msra.mxu0 0
      %918 = vmatprep.subr.bf16.mxu0 0
      %919 = vmatpush1.bf16.msra.mxu0 0
      %920 = vmatprep.subr.bf16.mxu0 0
      %921 = vmatpush1.bf16.msra.mxu0 0
      %922 = vmatprep.subr.bf16.mxu0 0
      %923 = vmatpush1.bf16.msra.mxu0 0
      %924 = vmatprep.subr.bf16.mxu0 0
      %925 = vmatpush1.bf16.msra.mxu0 0
      %926 = vmatprep.subr.bf16.mxu0 0
      %927 = vmatpush1.bf16.msra.mxu0 0
      %928 = vmatprep.subr.bf16.mxu0 0
      %929 = vmatpush1.bf16.msra.mxu0 0
      %930 = vmatprep.subr.bf16.mxu0 0
      %931 = vmatpush1.bf16.msra.mxu0 0
      %932 = vmatprep.subr.bf16.mxu0 0
      %933 = vmatpush1.bf16.msra.mxu0 0
      %934 = vmatprep.subr.bf16.mxu0 0
      %935 = vmatpush1.bf16.msra.mxu0 0
      %936 = vmatprep.mubr.bf16.mxu0 0
      %937 = vmatmul.mubr.bf16.gmra.mrb[0].mxu0 %v852
      %v938 = vpop.f32.mrb[0].mxu0
      %v939 = vadd.f32 0.0, %v938
      %v940 = vpop.f32.mrb[0].mxu0
      %v941 = vpop.f32.mrb[0].mxu0
      %v942 = vpop.f32.mrb[0].mxu0
      %943 = vdwg.mxu0
      %v944 = vadd.f32 %v834, %v898
      %v945 = vadd.f32 %v835, %v900
      %v946 = vadd.f32 %v836, %v939
      %s947 = scalar_lea.vmem %s1, 28
      %v948 = vld [vmem:[%s947] sm:$0xf]
      %949 = vrot.lane.b32.xlu0 %v185, 91
      %v950 = vpop.permute.xlu0 %949
      %951 = vrot.lane.b32.xlu0 %v186, 91
      %v952 = vpop.permute.xlu0 %951
      %953 = vrot.lane.b32.xlu0 %v187, 91
      %v954 = vpop.permute.xlu0 %953
      %955 = vrot.lane.b32.xlu0 %v188, 91
      %v956 = vpop.permute.xlu0 %955
      %vm957 = vcmask 744448
      %v958 = vsel %vm957, %v950, %v952
      %v959 = vsel %vm957, %v952, %v954
      %v960 = vsel %vm957, %v954, %v956
      %v962 = vsel %vm201, %v948, 0
      %v965 = vsel %vm205, %v958, 0
      %v968 = vsel %vm205, %v959, 0
      %v971 = vsel %vm205, %v960, 0
      %973 = vmatprep.subr.bf16.mxu0 %v968
      %974 = vmatpush1.bf16.msra.mxu0 %v965
      %975 = vmatprep.subr.bf16.mxu0 0
      %976 = vmatpush1.bf16.msra.mxu0 0
      %977 = vmatprep.subr.bf16.mxu0 0
      %978 = vmatpush1.bf16.msra.mxu0 0
      %979 = vmatprep.subr.bf16.mxu0 0
      %980 = vmatpush1.bf16.msra.mxu0 0
      %981 = vmatprep.subr.bf16.mxu0 0
      %982 = vmatpush1.bf16.msra.mxu0 0
      %983 = vmatprep.subr.bf16.mxu0 0
      %984 = vmatpush1.bf16.msra.mxu0 0
      %985 = vmatprep.subr.bf16.mxu0 0
      %986 = vmatpush1.bf16.msra.mxu0 0
      %987 = vmatprep.subr.bf16.mxu0 0
      %988 = vmatpush1.bf16.msra.mxu0 0
      %989 = vmatprep.subr.bf16.mxu0 0
      %990 = vmatpush1.bf16.msra.mxu0 0
      %991 = vmatprep.subr.bf16.mxu0 0
      %992 = vmatpush1.bf16.msra.mxu0 0
      %993 = vmatprep.subr.bf16.mxu0 0
      %994 = vmatpush1.bf16.msra.mxu0 0
      %995 = vmatprep.subr.bf16.mxu0 0
      %996 = vmatpush1.bf16.msra.mxu0 0
      %997 = vmatprep.subr.bf16.mxu0 0
      %998 = vmatpush1.bf16.msra.mxu0 0
      %999 = vmatprep.subr.bf16.mxu0 0
      %1000 = vmatpush1.bf16.msra.mxu0 0
      %1001 = vmatprep.subr.bf16.mxu0 0
      %1002 = vmatpush1.bf16.msra.mxu0 0
      %1003 = vmatprep.subr.bf16.mxu0 0
      %1004 = vmatpush1.bf16.msra.mxu0 0
      %1005 = vmatprep.mubr.bf16.mxu0 0
      %1006 = vmatmul.mubr.bf16.gmra.mrb[0].mxu0 %v962
      %v1007 = vpop.f32.mrb[0].mxu0
      %v1008 = vadd.f32 0.0, %v1007
      %v1009 = vpop.f32.mrb[0].mxu0
      %v1010 = vadd.f32 0.0, %v1009
      %v1011 = vpop.f32.mrb[0].mxu0
      %v1012 = vpop.f32.mrb[0].mxu0
      %1013 = vdwg.mxu0
      %1014 = vmatprep.subr.bf16.mxu0 0
      %1015 = vmatpush1.bf16.msra.mxu0 %v971
      %1016 = vmatprep.subr.bf16.mxu0 0
      %1017 = vmatpush1.bf16.msra.mxu0 0
      %1018 = vmatprep.subr.bf16.mxu0 0
      %1019 = vmatpush1.bf16.msra.mxu0 0
      %1020 = vmatprep.subr.bf16.mxu0 0
      %1021 = vmatpush1.bf16.msra.mxu0 0
      %1022 = vmatprep.subr.bf16.mxu0 0
      %1023 = vmatpush1.bf16.msra.mxu0 0
      %1024 = vmatprep.subr.bf16.mxu0 0
      %1025 = vmatpush1.bf16.msra.mxu0 0
      %1026 = vmatprep.subr.bf16.mxu0 0
      %1027 = vmatpush1.bf16.msra.mxu0 0
      %1028 = vmatprep.subr.bf16.mxu0 0
      %1029 = vmatpush1.bf16.msra.mxu0 0
      %1030 = vmatprep.subr.bf16.mxu0 0
      %1031 = vmatpush1.bf16.msra.mxu0 0
      %1032 = vmatprep.subr.bf16.mxu0 0
      %1033 = vmatpush1.bf16.msra.mxu0 0
      %1034 = vmatprep.subr.bf16.mxu0 0
      %1035 = vmatpush1.bf16.msra.mxu0 0
      %1036 = vmatprep.subr.bf16.mxu0 0
      %1037 = vmatpush1.bf16.msra.mxu0 0
      %1038 = vmatprep.subr.bf16.mxu0 0
      %1039 = vmatpush1.bf16.msra.mxu0 0
      %1040 = vmatprep.subr.bf16.mxu0 0
      %1041 = vmatpush1.bf16.msra.mxu0 0
      %1042 = vmatprep.subr.bf16.mxu0 0
      %1043 = vmatpush1.bf16.msra.mxu0 0
      %1044 = vmatprep.subr.bf16.mxu0 0
      %1045 = vmatpush1.bf16.msra.mxu0 0
      %1046 = vmatprep.mubr.bf16.mxu0 0
      %1047 = vmatmul.mubr.bf16.gmra.mrb[0].mxu0 %v962
      %v1048 = vpop.f32.mrb[0].mxu0
      %v1049 = vadd.f32 0.0, %v1048
      %v1050 = vpop.f32.mrb[0].mxu0
      %v1051 = vpop.f32.mrb[0].mxu0
      %v1052 = vpop.f32.mrb[0].mxu0
      %1053 = vdwg.mxu0
      %v1054 = vadd.f32 %v944, %v1008
      %v1055 = vadd.f32 %v945, %v1010
      %v1056 = vadd.f32 %v946, %v1049
      %s1057 = scalar_lea.vmem %s1, 32
      %v1058 = vld [vmem:[%s1057] sm:$0xf]
      %1059 = vrot.lane.b32.xlu0 %v185, 90
      %v1060 = vpop.permute.xlu0 %1059
      %1061 = vrot.lane.b32.xlu0 %v186, 90
      %v1062 = vpop.permute.xlu0 %1061
      %1063 = vrot.lane.b32.xlu0 %v187, 90
      %v1064 = vpop.permute.xlu0 %1063
      %1065 = vrot.lane.b32.xlu0 %v188, 90
      %v1066 = vpop.permute.xlu0 %1065
      %vm1067 = vcmask 736256
      %v1068 = vsel %vm1067, %v1060, %v1062
      %v1069 = vsel %vm1067, %v1062, %v1064
      %v1070 = vsel %vm1067, %v1064, %v1066
      %v1072 = vsel %vm201, %v1058, 0
      %v1075 = vsel %vm205, %v1068, 0
      %v1078 = vsel %vm205, %v1069, 0
      %v1081 = vsel %vm205, %v1070, 0
      %1083 = vmatprep.subr.bf16.mxu0 %v1078
      %1084 = vmatpush1.bf16.msra.mxu0 %v1075
      %1085 = vmatprep.subr.bf16.mxu0 0
      %1086 = vmatpush1.bf16.msra.mxu0 0
      %1087 = vmatprep.subr.bf16.mxu0 0
      %1088 = vmatpush1.bf16.msra.mxu0 0
      %1089 = vmatprep.subr.bf16.mxu0 0
      %1090 = vmatpush1.bf16.msra.mxu0 0
      %1091 = vmatprep.subr.bf16.mxu0 0
      %1092 = vmatpush1.bf16.msra.mxu0 0
      %1093 = vmatprep.subr.bf16.mxu0 0
      %1094 = vmatpush1.bf16.msra.mxu0 0
      %1095 = vmatprep.subr.bf16.mxu0 0
      %1096 = vmatpush1.bf16.msra.mxu0 0
      %1097 = vmatprep.subr.bf16.mxu0 0
      %1098 = vmatpush1.bf16.msra.mxu0 0
      %1099 = vmatprep.subr.bf16.mxu0 0
      %1100 = vmatpush1.bf16.msra.mxu0 0
      %1101 = vmatprep.subr.bf16.mxu0 0
      %1102 = vmatpush1.bf16.msra.mxu0 0
      %1103 = vmatprep.subr.bf16.mxu0 0
      %1104 = vmatpush1.bf16.msra.mxu0 0
      %1105 = vmatprep.subr.bf16.mxu0 0
      %1106 = vmatpush1.bf16.msra.mxu0 0
      %1107 = vmatprep.subr.bf16.mxu0 0
      %1108 = vmatpush1.bf16.msra.mxu0 0
      %1109 = vmatprep.subr.bf16.mxu0 0
      %1110 = vmatpush1.bf16.msra.mxu0 0
      %1111 = vmatprep.subr.bf16.mxu0 0
      %1112 = vmatpush1.bf16.msra.mxu0 0
      %1113 = vmatprep.subr.bf16.mxu0 0
      %1114 = vmatpush1.bf16.msra.mxu0 0
      %1115 = vmatprep.mubr.bf16.mxu0 0
      %1116 = vmatmul.mubr.bf16.gmra.mrb[0].mxu0 %v1072
      %v1117 = vpop.f32.mrb[0].mxu0
      %v1118 = vadd.f32 0.0, %v1117
      %v1119 = vpop.f32.mrb[0].mxu0
      %v1120 = vadd.f32 0.0, %v1119
      %v1121 = vpop.f32.mrb[0].mxu0
      %v1122 = vpop.f32.mrb[0].mxu0
      %1123 = vdwg.mxu0
      %1124 = vmatprep.subr.bf16.mxu0 0
      %1125 = vmatpush1.bf16.msra.mxu0 %v1081
      %1126 = vmatprep.subr.bf16.mxu0 0
      %1127 = vmatpush1.bf16.msra.mxu0 0
      %1128 = vmatprep.subr.bf16.mxu0 0
      %1129 = vmatpush1.bf16.msra.mxu0 0
      %1130 = vmatprep.subr.bf16.mxu0 0
      %1131 = vmatpush1.bf16.msra.mxu0 0
      %1132 = vmatprep.subr.bf16.mxu0 0
      %1133 = vmatpush1.bf16.msra.mxu0 0
      %1134 = vmatprep.subr.bf16.mxu0 0
      %1135 = vmatpush1.bf16.msra.mxu0 0
      %1136 = vmatprep.subr.bf16.mxu0 0
      %1137 = vmatpush1.bf16.msra.mxu0 0
      %1138 = vmatprep.subr.bf16.mxu0 0
      %1139 = vmatpush1.bf16.msra.mxu0 0
      %1140 = vmatprep.subr.bf16.mxu0 0
      %1141 = vmatpush1.bf16.msra.mxu0 0
      %1142 = vmatprep.subr.bf16.mxu0 0
      %1143 = vmatpush1.bf16.msra.mxu0 0
      %1144 = vmatprep.subr.bf16.mxu0 0
      %1145 = vmatpush1.bf16.msra.mxu0 0
      %1146 = vmatprep.subr.bf16.mxu0 0
      %1147 = vmatpush1.bf16.msra.mxu0 0
      %1148 = vmatprep.subr.bf16.mxu0 0
      %1149 = vmatpush1.bf16.msra.mxu0 0
      %1150 = vmatprep.subr.bf16.mxu0 0
      %1151 = vmatpush1.bf16.msra.mxu0 0
      %1152 = vmatprep.subr.bf16.mxu0 0
      %1153 = vmatpush1.bf16.msra.mxu0 0
      %1154 = vmatprep.subr.bf16.mxu0 0
      %1155 = vmatpush1.bf16.msra.mxu0 0
      %1156 = vmatprep.mubr.bf16.mxu0 0
      %1157 = vmatmul.mubr.bf16.gmra.mrb[0].mxu0 %v1072
      %v1158 = vpop.f32.mrb[0].mxu0
      %v1159 = vadd.f32 0.0, %v1158
      %v1160 = vpop.f32.mrb[0].mxu0
      %v1161 = vpop.f32.mrb[0].mxu0
      %v1162 = vpop.f32.mrb[0].mxu0
      %1163 = vdwg.mxu0
      %v1164 = vadd.f32 %v1054, %v1118
      %v1165 = vadd.f32 %v1055, %v1120
      %v1166 = vadd.f32 %v1056, %v1159
      %v1167 = vld [vmem:[%s2] sm:$0xff]
      %1169 = vset.pattern.permute.xlu0 0
      %1170 = vperm.xlu0 %1169, %v1167
      %v1171 = vpop.permute.xlu0 %1170
      %v1173 = vadd.f32 %v1164, %v1171
      %v1174 = vadd.f32 %v1165, %v1171
      %v1175 = vadd.f32 %v1166, %v1171
      %v1176 = vmax.f32 %v1173, 0.0
      %v1177 = vmax.f32 %v1174, 0.0
      %v1178 = vmax.f32 %v1175, 0.0
      %1179 = vst [vmem:[%s170] sm:$0xff] %v1176
      %1180 = vst [vmem:[%s170 + $0x8] sm:$0xff] %v1177
      %1181 = vst [vmem:[%s170 + $0x10] sm:$0xff] %v1178
      %p1182 = scmp.lt.s32.totalorder %s14, 1
      %s1183 = scalar_select %p1182, %s14, 1
      %s1184 = smul.addr %s1183, 3
      %s1185 = smul.addr %s1184, 8
      %s1186 = scalar_lea.vmem %s3, %s1185
      // Predicated region
      $region33: #{conv2d_bn_act.1} parent=31 // pred_check
        %p1187 = pneg %p100
      $region34: #{conv2d_bn_act.1} parent=31 // pred_check_branch
        %1189 = sbr.rel (%p1187) target = $region36
      $region35: #{conv2d_bn_act.1} parent=31 // pred_region
        _
      $region36: #{conv2d_bn_act.1} parent=31 // pred_fallthru
        _
    $region32: #{conv2d_bn_act.1} parent=5 // pred_fallthru
      _
    %p1190 = scmp.le.s32.totalorder 2, %s9
    // Predicated region
    $region37: #{conv2d_bn_act.1} parent=5 // pred_check
      %p1191 = pneg %p1190
    $region38: #{conv2d_bn_act.1} parent=5 // pred_check_branch
      %1193 = sbr.rel (%p1191) target = $region40
    $region39: #{conv2d_bn_act.1} parent=5 // pred_region
      %s1194 = ssub.s32 %s9, 2
      // Predicated region
      $region41: #{conv2d_bn_act.1} parent=39 // pred_check
        %p1195 = pneg %p106
      $region42: #{conv2d_bn_act.1} parent=39 // pred_check_branch
        %1197 = sbr.rel (%p1195) target = $region44
      $region43: #{conv2d_bn_act.1} parent=39 // pred_region
        %p1198 = scmp.lt.s32.totalorder %s15, 1
        %s1199 = scalar_select %p1198, %s15, 1
        %s1200 = smul.addr %s1199, 3
        %s1201 = smul.addr %s1200, 8
        %s1202 = scalar_lea.vmem %s3, %s1201
      $region44: #{conv2d_bn_act.1} parent=39 // pred_fallthru
        _
    $region40: #{conv2d_bn_act.1} parent=5 // pred_fallthru
      _
  $region6: #{conv2d_bn_act.1} parent=0 // loop_footer
    %s13 = sadd.s32 1, %s9
  $region7: #{conv2d_bn_act.1} parent=0 // loop_footer_branch
    %8 = sbr.rel target = $region3
  $region8: #{conv2d_bn_act.1} parent=0 // loop_exit
    _

</llo_original>
